<compile_context>
chip_gen: v6e
topology: v6e:2x2x1
jax: 0.10.0
libtpu: 0.0.40
codegen_flags: <defaults>
</compile_context>

<pallas_src>
import functools

import jax
import jax.numpy as jnp
from jax import lax
from jax.experimental import pallas as pl
from jax.experimental.pallas import tpu as pltpu


def _round_up(x, m):
    return ((x + m - 1) // m) * m


def _choose_tile_n(n_rows, d, itemsize, *,
                   vmem_budget_bytes=16 << 20,      # a/b double-buffers budget
                   target_block_bytes=2 << 20):     # ~2 MiB HBM per input block
    """Pick a row-tile size: big enough to amortize per-step overhead, small
    enough that the double-buffered a/b pipeline stays well inside VMEM on
    every generation (incl. v7x's 64 MiB), always a multiple of 8."""
    d = int(d)
    d_lanes = _round_up(max(d, 1), 128)              # VMEM lane-pads D < 128
    per_row_vmem = 4 * d_lanes * itemsize            # 2 inputs x 2 buffers
    vmem_rows = max(8, vmem_budget_bytes // per_row_vmem)
    target_rows = max(8, target_block_bytes // max(1, d * itemsize))
    tile = min(vmem_rows, target_rows)
    tile = min(tile, _round_up(n_rows, 8))
    if n_rows > 8:
        # Prefer >= 2 grid steps so both v7x TensorCores get work.
        tile = min(tile, _round_up(-(-n_rows // 2), 8))
    tile = max(8, (tile // 8) * 8)
    return int(tile)


def _hinge_kernel(a_ref, b_ref, w_ref, out_ref, *, sign, offset, n_rows, tile_n):
    """Per-tile sum of relu(sign * dist + offset), dist = sum_d w[d]*(a-b)^2."""
    a = a_ref[...].astype(jnp.float32)                      # (tile_n, D)
    b = b_ref[...].astype(jnp.float32)                      # (tile_n, D)
    diff = a - b
    sq = diff * diff                                        # VPU

    w = w_ref[...]                                          # (1, D) f32, lane-dense
    # Weighted row-reduce: VPU multiply + XLU lane reduce (no MXU, full f32).
    dist = jnp.sum(sq * w, axis=-1, keepdims=True)          # (tile_n, 1)

    # Hinge: positives sign=+1, offset=-margin1 -> relu(dist - margin1)
    #        negatives sign=-1, offset=+margin2 -> relu(margin2 - dist)
    term = jnp.maximum(sign * dist + offset, 0.0)           # (tile_n, 1)

    # Mask rows past the logical end: the last block may extend beyond n_rows
    # and its padded DMA contents are unspecified (possibly NaN) -> use where.
    row = pl.program_id(0) * tile_n + lax.broadcasted_iota(jnp.int32, term.shape, 0)
    term = jnp.where(row < n_rows, term, 0.0)

    # Lane-dense (1, 8, 128) partial-sum block; wrapper reads element [i, 0, 0].
    out_ref[...] = jnp.broadcast_to(jnp.sum(term), out_ref.shape)


def _hinge_sum(x1, x2, w_row, *, sign, offset):
    """Sum over rows of relu(sign * dist(x1[i], x2[i]) + offset)."""
    assert x1.shape == x2.shape and x1.ndim == 2
    n_rows, d = x1.shape
    if n_rows == 0:
        return jnp.float32(0.0)

    itemsize = max(x1.dtype.itemsize, x2.dtype.itemsize)
    tile_n = _choose_tile_n(n_rows, d, itemsize)
    num_tiles = pl.cdiv(n_rows, tile_n)

    kernel = functools.partial(_hinge_kernel, sign=float(sign),
                               offset=float(offset), n_rows=int(n_rows),
                               tile_n=int(tile_n))

    bytes_accessed = int(x1.size * x1.dtype.itemsize + x2.size * x2.dtype.itemsize
                         + w_row.size * 4 + num_tiles * 8 * 128 * 4)
    cost = pl.CostEstimate(flops=int(n_rows * (4 * d + 4)),
                           transcendentals=0,
                           bytes_accessed=bytes_accessed)

    partials = pl.pallas_call(
        kernel,
        out_shape=jax.ShapeDtypeStruct((num_tiles, 8, 128), jnp.float32),
        grid=(num_tiles,),
        in_specs=[
            pl.BlockSpec((tile_n, d), lambda i: (i, 0)),     # x1 tile (native dtype)
            pl.BlockSpec((tile_n, d), lambda i: (i, 0)),     # x2 tile (native dtype)
            pl.BlockSpec((1, d), lambda i: (0, 0)),          # resident weight row
        ],
        out_specs=pl.BlockSpec((1, 8, 128), lambda i: (i, 0, 0)),
        compiler_params=pltpu.CompilerParams(
            dimension_semantics=("parallel",),               # independent tiles
            vmem_limit_bytes=32 * 1024 * 1024),              # safe on v5e/v6e/v7x
        cost_estimate=cost,
    )(x1, x2, w_row)

    return jnp.sum(partials[:, 0, 0])


def metric_learning_loss(p1, p2, n1, n2, weights, *, margin1, margin2, beta):
    """Positive pairs (p1[i], p2[i]), negative pairs (n1[j], n2[j])."""
    assert p1.shape == p2.shape and n1.shape == n2.shape
    assert p1.shape[-1] == n1.shape[-1] == weights.shape[-1]

    w_row = weights.reshape(1, -1).astype(jnp.float32)       # (1, D), lane-dense

    pos = _hinge_sum(p1, p2, w_row, sign=1.0, offset=-float(margin1))
    neg = _hinge_sum(n1, n2, w_row, sign=-1.0, offset=float(margin2))

    # Hoisted L2 regularizer: beta * ||w||^2 (== beta * torch.norm(w) ** 2).
    reg = float(beta) * jnp.sum(w_row * w_row)
    return pos + neg + reg


def _reference_loss(p1, p2, n1, n2, weights, margin1, margin2, beta):
    w = weights.astype(jnp.float32)
    pos_d = jnp.sum(w * (p1.astype(jnp.float32) - p2.astype(jnp.float32)) ** 2, axis=-1)
    neg_d = jnp.sum(w * (n1.astype(jnp.float32) - n2.astype(jnp.float32)) ** 2, axis=-1)
    loss = jnp.sum(jnp.maximum(pos_d - margin1, 0.0))
    loss += jnp.sum(jnp.maximum(margin2 - neg_d, 0.0))
    loss += beta * jnp.sum(w * w)
    return loss


if __name__ == "__main__":
    # Small deterministic shapes: 8 positive pairs, 12 negative pairs, D = 32.
    # (Nn = 12 is deliberately not a multiple of the tile to exercise the
    #  in-kernel tail masking of the last partial block.)
    Np, Nn, D = 8, 12, 32
    margin1, margin2, beta = 0.5, 4.0, 1e-3

    key = jax.random.PRNGKey(0)
    k1, k2, k3, k4, kw = jax.random.split(key, 5)
    p1 = jax.random.normal(k1, (Np, D), jnp.float32)
    p2 = jax.random.normal(k2, (Np, D), jnp.float32)
    n1 = jax.random.normal(k3, (Nn, D), jnp.float32)
    n2 = jax.random.normal(k4, (Nn, D), jnp.float32)
    # Deterministic "dist_func.weights" parameter (positive, synthetic init).
    weights = jax.random.uniform(kw, (D,), jnp.float32, minval=0.1, maxval=1.0)

    # f32 inputs
    loss = metric_learning_loss(p1, p2, n1, n2, weights,
                                margin1=margin1, margin2=margin2, beta=beta)
    loss = jax.block_until_ready(loss)
    ref = _reference_loss(p1, p2, n1, n2, weights, margin1, margin2, beta)
    assert jnp.allclose(loss, ref, rtol=1e-5, atol=1e-3), (loss, ref)

    # Native bf16 inputs (no wrapper upcast): kernel casts to f32 internally.
    p1b, p2b = p1.astype(jnp.bfloat16), p2.astype(jnp.bfloat16)
    n1b, n2b = n1.astype(jnp.bfloat16), n2.astype(jnp.bfloat16)
    loss_bf16 = metric_learning_loss(p1b, p2b, n1b, n2b, weights,
                                     margin1=margin1, margin2=margin2, beta=beta)
    loss_bf16 = jax.block_until_ready(loss_bf16)
    ref_bf16 = _reference_loss(p1b, p2b, n1b, n2b, weights, margin1, margin2, beta)
    assert jnp.allclose(loss_bf16, ref_bf16, rtol=5e-3, atol=1e-2), (loss_bf16, ref_bf16)

    print("KERNEL_OK")
</pallas_src>

<mosaic_0001>
module attributes {stable_mosaic.version = 11 : i64} {
  func.func @_hinge_kernel(%arg0: i32, %arg1: memref<8x32xf32, #tpu.memory_space<vmem>>, %arg2: memref<8x32xf32, #tpu.memory_space<vmem>>, %arg3: memref<1x32xf32, #tpu.memory_space<vmem>>, %arg4: memref<1x8x128xf32, #tpu.memory_space<vmem>>) attributes {dimension_semantics = [#tpu.dimension_semantics<parallel>], iteration_bounds = array<i64: 1>, scalar_prefetch = 0 : i64, scratch_operands = 0 : i64, tpu.core_type = #tpu.core_type<tc>, window_params = [{transform_indices = @transform_0, window_bounds = array<i64: 8, 32>}, {transform_indices = @transform_1, window_bounds = array<i64: 8, 32>}, {pipeline_mode = #tpu.pipeline_mode<synchronous>, transform_indices = @transform_2, window_bounds = array<i64: 1, 32>}, {transform_indices = @transform_3, window_bounds = array<i64: 1, 8, 128>}]} {
    %c0 = arith.constant 0 : index
    %c0_0 = arith.constant 0 : index
    %0 = vector.load %arg1[%c0, %c0_0] : memref<8x32xf32, #tpu.memory_space<vmem>>, vector<8x32xf32>
    %c0_1 = arith.constant 0 : index
    %c0_2 = arith.constant 0 : index
    %1 = vector.load %arg2[%c0_1, %c0_2] : memref<8x32xf32, #tpu.memory_space<vmem>>, vector<8x32xf32>
    %2 = arith.subf %0, %1 : vector<8x32xf32>
    %3 = arith.mulf %2, %2 : vector<8x32xf32>
    %c0_3 = arith.constant 0 : index
    %c0_4 = arith.constant 0 : index
    %4 = vector.load %arg3[%c0_3, %c0_4] : memref<1x32xf32, #tpu.memory_space<vmem>>, vector<1x32xf32>
    %5 = vector.broadcast %4 : vector<1x32xf32> to vector<8x32xf32>
    %6 = arith.mulf %3, %5 : vector<8x32xf32>
    %cst = arith.constant dense<0.000000e+00> : vector<8xf32>
    %7 = vector.multi_reduction <add>, %6, %cst [1] : vector<8x32xf32> to vector<8xf32>
    %8 = vector.shape_cast %7 : vector<8xf32> to vector<8x1xf32>
    %cst_5 = arith.constant 1.000000e+00 : f32
    %9 = vector.broadcast %cst_5 : f32 to vector<8x1xf32>
    %10 = arith.mulf %9, %8 : vector<8x1xf32>
    %cst_6 = arith.constant -5.000000e-01 : f32
    %11 = vector.broadcast %cst_6 : f32 to vector<8x1xf32>
    %12 = arith.addf %10, %11 : vector<8x1xf32>
    %cst_7 = arith.constant 0.000000e+00 : f32
    %13 = vector.broadcast %cst_7 : f32 to vector<8x1xf32>
    %14 = arith.maximumf %12, %13 : vector<8x1xf32>
    %c8_i32 = arith.constant 8 : i32
    %15 = arith.muli %arg0, %c8_i32 : i32
    %16 = tpu.iota {dimensions = array<i32: 0>} : vector<8x1xi32>
    %17 = vector.broadcast %15 : i32 to vector<8x1xi32>
    %18 = arith.addi %17, %16 : vector<8x1xi32>
    %c8_i32_8 = arith.constant 8 : i32
    %19 = vector.broadcast %c8_i32_8 : i32 to vector<8x1xi32>
    %20 = arith.cmpi slt, %18, %19 : vector<8x1xi32>
    %cst_9 = arith.constant 0.000000e+00 : f32
    %21 = vector.broadcast %cst_9 : f32 to vector<8x1xf32>
    %22 = arith.select %20, %14, %21 : vector<8x1xi1>, vector<8x1xf32>
    %23 = vector.shape_cast %22 : vector<8x1xf32> to vector<1x8x1xf32>
    %cst_10 = arith.constant dense<0.000000e+00> : vector<1xf32>
    %24 = vector.multi_reduction <add>, %23, %cst_10 [1, 2] : vector<1x8x1xf32> to vector<1xf32>
    %25 = vector.shape_cast %24 : vector<1xf32> to vector<1x1x1xf32>
    %26 = vector.extract %25[0, 0, 0] : f32 from vector<1x1x1xf32>
    %27 = vector.broadcast %26 : f32 to vector<1x8x128xf32>
    %c0_11 = arith.constant 0 : index
    %c0_12 = arith.constant 0 : index
    %c0_13 = arith.constant 0 : index
    %28 = vector.load %arg4[%c0_11, %c0_12, %c0_13] : memref<1x8x128xf32, #tpu.memory_space<vmem>>, vector<1x8x128xf32>
    tpu.vector_store %arg4[%c0_11, %c0_12, %c0_13], %27 {strides = array<i32>} : memref<1x8x128xf32, #tpu.memory_space<vmem>>, vector<1x8x128xf32>,
    return
  }
  func.func @transform_0(%arg0: i32) -> (i32, i32) {
    %c0_i32 = arith.constant 0 : i32
    %c0_i32_0 = arith.constant 0 : i32
    return %arg0, %c0_i32 : i32, i32
  }
  func.func @transform_1(%arg0: i32) -> (i32, i32) {
    %c0_i32 = arith.constant 0 : i32
    %c0_i32_0 = arith.constant 0 : i32
    return %arg0, %c0_i32 : i32, i32
  }
  func.func @transform_2(%arg0: i32) -> (i32, i32) {
    %c0_i32 = arith.constant 0 : i32
    %c0_i32_0 = arith.constant 0 : i32
    %c0_i32_1 = arith.constant 0 : i32
    return %c0_i32, %c0_i32_0 : i32, i32
  }
  func.func @transform_3(%arg0: i32) -> (i32, i32, i32) {
    %c0_i32 = arith.constant 0 : i32
    %c0_i32_0 = arith.constant 0 : i32
    %c0_i32_1 = arith.constant 0 : i32
    return %arg0, %c0_i32, %c0_i32_0 : i32, i32, i32
  }
}

</mosaic_0001>

<llo_original>
// kernel: tpu_custom_call.1
$region0: #{tpu_custom_call.1}
  #allocation0 [shape = 'u32[]', space=smem, size = 0x4, offset = 0x4, fixed_abs, tag = 'smem constant byte address 0x4 - core index']
  #allocation1 [shape = 'u32[144,128]{1,0:T(1,128)}', space=vmem, size = 0x12000, scoped, tag = 'internal scratch']
  %s0 = inlined_call_operand.hbm [shape: f32[8,32], index: 0, kind: input, shape index: {}]
  %s1 = inlined_call_operand.hbm [shape: f32[8,32], index: 1, kind: input, shape index: {}]
  %s2 = inlined_call_operand.vmem [shape: f32[1,32], index: 2, kind: input, shape index: {}]
  %s3 = inlined_call_operand.hbm [shape: f32[1,8,128], index: 3, kind: output, shape index: {}]
  %s4 = sld [smem:[#allocation0]]
  $region30: #{tpu_custom_call.1} parent=0
    _
  %s6 = ssub.s32 1, %s4
  %s7 = scalar_select 0, %s6, %s4
  $region1: #{tpu_custom_call.1} parent=0
    #allocation2 [shape = 'u8[4096]{0}', space=vmem, size = 0x1000, scoped, tag = 'input window, operand 0, single buffered']
    #allocation3 [shape = 's32[1]{0}', space=sflag, size = 0x4, scoped, tag = 'scoped memory for tpu_custom_call.1']
    #allocation4 [shape = 's32[1]{0}', space=sflag, size = 0x4, scoped, tag = 'scoped memory for tpu_custom_call.1']
    #allocation5 [shape = 'u8[4096]{0}', space=vmem, size = 0x1000, scoped, tag = 'input window, operand 1, single buffered']
    #allocation6 [shape = 's32[1]{0}', space=sflag, size = 0x4, scoped, tag = 'scoped memory for tpu_custom_call.1']
    #allocation7 [shape = 'u8[4096]{0}', space=vmem, size = 0x1000, scoped, tag = 'output window, operand 0, single buffered']
    %8 = vsyncpa [#allocation3], 0
    %9 = vsyncpa [#allocation6], 0
    %10 = vsyncpa [#allocation4], 0
    // Predicated region
    $region2: #{tpu_custom_call.1} parent=1 // pred_check
      _
    $region3: #{tpu_custom_call.1} parent=1 // pred_check_branch
      %12 = sbr.rel (0) target = $region5
    $region4: #{tpu_custom_call.1} parent=1 // pred_region
      %s14 = ssub.s32 128, 128
      %15 = vsyncadd [#allocation3], %s14
      %s17 = sshll.u32 [#allocation2], 4
      %s18 = int_to_ptr.vmem [resolvable:$true] %s17
      %20 = dma.hbm_to_vmem [thread:$0]  %s0, 128, %s18, [#allocation3]
    $region5: #{tpu_custom_call.1} parent=1 // pred_fallthru
      _
    // Predicated region
    $region6: #{tpu_custom_call.1} parent=1 // pred_check
      _
    $region7: #{tpu_custom_call.1} parent=1 // pred_check_branch
      %22 = sbr.rel (0) target = $region9
    $region8: #{tpu_custom_call.1} parent=1 // pred_region
      %s24 = ssub.s32 128, 128
      %25 = vsyncadd [#allocation6], %s24
      %s27 = sshll.u32 [#allocation5], 4
      %s28 = int_to_ptr.vmem [resolvable:$true] %s27
      %30 = dma.hbm_to_vmem [thread:$0]  %s1, 128, %s28, [#allocation6]
    $region9: #{tpu_custom_call.1} parent=1 // pred_fallthru
      _
    // Predicated region
    $region10: #{tpu_custom_call.1} parent=1 // pred_check
      _
    $region11: #{tpu_custom_call.1} parent=1 // pred_check_branch
      %32 = sbr.rel (0) target = $region13
    $region12: #{tpu_custom_call.1} parent=1 // pred_region
      _
    $region13: #{tpu_custom_call.1} parent=1 // pred_fallthru
      _
    // Predicated region
    $region14: #{tpu_custom_call.1} parent=1 // pred_check
      _
    $region15: #{tpu_custom_call.1} parent=1 // pred_check_branch
      %34 = sbr.rel (0) target = $region17
    $region16: #{tpu_custom_call.1} parent=1 // pred_region
      %35 = dma.done [#allocation3], 128
    $region17: #{tpu_custom_call.1} parent=1 // pred_fallthru
      _
    // Predicated region
    $region18: #{tpu_custom_call.1} parent=1 // pred_check
      _
    $region19: #{tpu_custom_call.1} parent=1 // pred_check_branch
      %37 = sbr.rel (0) target = $region21
    $region20: #{tpu_custom_call.1} parent=1 // pred_region
      %38 = dma.done [#allocation6], 128
    $region21: #{tpu_custom_call.1} parent=1 // pred_fallthru
      _
    %v39 = vld [vmem:[#allocation2] sm:$0xff]
    %v40 = vld [vmem:[#allocation5] sm:$0xff]
    %v41 = vsub.f32 %v39, %v40
    %v42 = vmul.f32 %v41, %v41
    %v43 = vld [vmem:[%s2] sm:$0x1]
    %v45 = vlaneseq
    %v46 = vshrl.u32 %v45, 7
    %v47 = vsub.s32 0, %v46
    %v48 = vrot.slane %v43, %v47
    %v50 = vmul.f32 %v42, %v48
    %vm51 = vcmask 261120
    %v52 = vsel %vm51, %v50, 0.0
    %53 = vadd.xlane.f32.xlu0 %v52
    %v54 = vpop.xlane.xlu0 %53
    %v55 = vadd.f32 %v54, -0.5
    %v56 = vmax.f32 %v55, 0.0
    %s57 = smul.u32 0, 8
    %v58 = vlaneseq
    %v59 = vshrl.u32 %v58, 7
    %v60 = vstv %s57
    %v61 = vadd.s32 %v60, %v59
    %vm62 = vcmp.lt.s32.totalorder %v61, 8
    %v63 = vsel %vm62, %v56, 0.0
    %vm64 = vcmask 7168
    %v65 = vsel %vm64, %v63, 0.0
    %66 = vadd.xlane.f32.xlu0 %v65
    %v67 = vpop.xlane.xlu0 %66
    %v68 = vrot.slane %v67, 4
    %v69 = vadd.f32 %v67, %v68
    %v70 = vrot.slane %v69, 2
    %v71 = vadd.f32 %v69, %v70
    %v72 = vrot.slane %v71, 1
    %v73 = vadd.f32 %v71, %v72
    %s74 = vtos %v73
    %v75 = vstv %s74
    %76 = vst [vmem:[#allocation7] sm:$0xff] %v75
    // Predicated region
    $region22: #{tpu_custom_call.1} parent=1 // pred_check
      _
    $region23: #{tpu_custom_call.1} parent=1 // pred_check_branch
      %78 = sbr.rel (0) target = $region25
    $region24: #{tpu_custom_call.1} parent=1 // pred_region
      %s80 = ssub.s32 128, 128
      %81 = vsyncadd [#allocation4], %s80
      %s83 = sshll.u32 [#allocation7], 4
      %s84 = int_to_ptr.vmem [resolvable:$true] %s83
      %86 = dma.vmem_to_hbm [thread:$0]  %s84, 128, %s3, [#allocation4]
    $region25: #{tpu_custom_call.1} parent=1 // pred_fallthru
      _
    // Predicated region
    $region26: #{tpu_custom_call.1} parent=1 // pred_check
      _
    $region27: #{tpu_custom_call.1} parent=1 // pred_check_branch
      %88 = sbr.rel (0) target = $region29
    $region28: #{tpu_custom_call.1} parent=1 // pred_region
      %89 = dma.done [#allocation4], 128
    $region29: #{tpu_custom_call.1} parent=1 // pred_fallthru
      _
    %90 = vsyncpa [#allocation3], 1
    %91 = vsyncpa [#allocation6], 1
    %92 = vsyncpa [#allocation4], 1

</llo_original>
